<compile_context>
chip_gen: v5e
topology: v5e:2x2
jax: 0.10.0
libtpu: 0.0.40
codegen_flags: <defaults>
</compile_context>

<pallas_src>
import functools

import jax
import jax.numpy as jnp
from jax.experimental import pallas as pl
from jax.experimental.pallas import tpu as pltpu

BN_EPS = 1e-5
LANE = 128
TK_CAP = 4096           # largest K tile we ever ask for
VMEM_FALLBACK = 64 << 20  # assume smallest per-TC VMEM (v7x) if query fails


def _round_up(n, m):
    return (n + m - 1) // m * m


def _cdiv(a, b):
    return -(-a // b)


def _vmem_capacity_bytes():
    try:
        return int(pltpu.get_tpu_info().vmem_capacity_bytes)
    except Exception:
        return VMEM_FALLBACK


def _apply_act(h, act: str):
    if act == "relu":
        return jnp.maximum(h, 0.0)
    if act == "sigmoid":
        return jax.nn.sigmoid(h)
    if act == "tanh":
        return jnp.tanh(h)
    if act == "identity":
        return h
    raise ValueError(f"unsupported activation: {act}")


def _fused_netblock_kernel(x_ref, *refs, nlayer, acts):
    """refs = (w0, gb0, w1, gb1, ..., w_{L-1}, gb_{L-1}, o_ref, acc_ref).

    Grid axis 0 tiles layer-0's reduction dim (Din).  Later layers are small
    and run entirely in the finalize step on the last grid iteration.
    """
    o_ref = refs[2 * nlayer]
    acc_ref = refs[2 * nlayer + 1]
    k = pl.program_id(0)

    @pl.when(k == 0)
    def _init():
        acc_ref[...] = jnp.zeros_like(acc_ref)

    # Layer 0 matmul, K-tiled: acc += x_block @ W0_block (bf16 MXU, f32 acc).
    acc_ref[...] += jnp.dot(x_ref[...], refs[0][...],
                            preferred_element_type=jnp.float32)

    @pl.when(k == pl.num_programs(0) - 1)
    def _finalize():
        h = acc_ref[...]
        for i in range(nlayer):
            if i > 0:
                # Later layers are tiny; keep them in f32 for PyTorch parity.
                h = jnp.dot(h, refs[2 * i][...],
                            preferred_element_type=jnp.float32)
            gb = refs[2 * i + 1][...]            # (2, Dp) = [gamma; beta]
            gamma = gb[0:1, :]
            beta = gb[1:2, :]
            # BatchNorm1d, training-mode batch statistics (biased variance).
            mean = jnp.mean(h, axis=0, keepdims=True)
            centered = h - mean
            var = jnp.mean(centered * centered, axis=0, keepdims=True)
            h = centered * jax.lax.rsqrt(var + BN_EPS)
            h = h * gamma + beta
            h = _apply_act(h, acts[i])
            # Inter-layer dropout: identity (p = 0 in this config).
        o_ref[...] = h.astype(o_ref.dtype)


def init_netblock_params(key, nlayer, dim_list):
    """Parameters matching the PyTorch module, padded / packed for the kernel.

    Linear.weight: xavier_uniform_, (Dout, Din) -> stored transposed
      (Din_pad, Dout_pad), zero-padded.  Layer 0 is cast to bf16 (it is the
      bandwidth-dominant weight); later layers stay f32 for parity.
    Linear.bias:   omitted (exactly cancelled by BN batch-mean subtraction).
    BatchNorm1d:   gamma = 1, beta = 0, packed as one (2, Dout_pad) f32 array;
      padded feature columns get gamma = beta = 0 (self-masking).
    """
    dims_pad = [_round_up(d, LANE) for d in dim_list]
    params = []
    for i in range(nlayer):
        din, dout = dim_list[i], dim_list[i + 1]
        dinp, doutp = dims_pad[i], dims_pad[i + 1]
        key, kw = jax.random.split(key)
        bound = float(jnp.sqrt(6.0 / (din + dout)))
        w = jax.random.uniform(kw, (dout, din), jnp.float32, -bound, bound)
        wt = jnp.pad(w.T, ((0, dinp - din), (0, doutp - dout)))
        if i == 0:
            wt = wt.astype(jnp.bfloat16)
        gb = jnp.zeros((2, doutp), jnp.float32).at[0, :dout].set(1.0)
        params.append((wt, gb))
    return params


def netblock_forward(x, params, dim_list, act_list, *, tk_cap=TK_CAP):
    nlayer = len(params)
    B = x.shape[0]
    dims_pad = [params[0][0].shape[0]] + [p[0].shape[1] for p in params]
    din_pad, d1_pad, dout_pad = dims_pad[0], dims_pad[1], dims_pad[-1]

    # ---- generation-aware VMEM budget, used for both tk sizing and the cap.
    vmem_budget = (3 * _vmem_capacity_bytes()) // 4

    # Fixed (K-tile-independent) VMEM footprint.
    fixed = B * d1_pad * 4                         # f32 accumulator scratch
    fixed += 2 * B * dout_pad * 4                  # output (double-buffered)
    for i in range(1, nlayer):
        fixed += dims_pad[i] * dims_pad[i + 1] * 4  # later weights, f32, 1 buf
    for i in range(nlayer):
        fixed += 8 * dims_pad[i + 1] * 4            # gamma/beta (sublane-padded)
    fixed += 2 << 20                                # compiler headroom

    # Streamed bytes per unit of tk: bf16 x block + bf16 w0 block, 2 buffers.
    per_tk = 2 * B * 2 + 2 * d1_pad * 2
    avail = max(vmem_budget - fixed, LANE * per_tk)
    tk_budget = max(LANE, min(tk_cap, (avail // per_tk) // LANE * LANE))

    # No degenerate-tk fallback: pick the step count from the budget, then
    # pad Din up to kt * tk (extra zero rows/cols are self-masking).
    kt = _cdiv(din_pad, tk_budget)
    tk = _round_up(_cdiv(din_pad, kt), LANE)
    din_full = kt * tk

    # noise_dropout: identity (noise_rate = 0).  Zero-pad features and
    # pre-cast to bf16 in the wrapper (halves x DMA bytes, no in-kernel cast).
    xp = jnp.pad(x.astype(jnp.bfloat16),
                 ((0, 0), (0, din_full - dim_list[0])))

    w0 = params[0][0]
    if din_full > din_pad:
        w0 = jnp.pad(w0, ((0, din_full - din_pad), (0, 0)))

    flat_inputs = [xp]
    for i, (wt, gb) in enumerate(params):
        flat_inputs.append(w0 if i == 0 else wt)
        flat_inputs.append(gb)

    def make_in_specs(single_buffer_invariants):
        inv = ({"pipeline_mode": pl.Buffered(1)}
               if single_buffer_invariants else {})
        specs = [pl.BlockSpec((B, tk), lambda k: (0, k))]
        for i, (wt, gb) in enumerate(params):
            if i == 0:
                specs.append(pl.BlockSpec((tk, d1_pad), lambda k: (k, 0)))
            else:
                specs.append(pl.BlockSpec(wt.shape, lambda k: (0, 0), **inv))
            specs.append(pl.BlockSpec(gb.shape, lambda k: (0, 0), **inv))
        return specs

    out_spec = pl.BlockSpec((B, dout_pad), lambda k: (0, 0))

    # Raise the scoped VMEM limit only when needed, capped by the per-core
    # capacity-derived budget (<= ~48 MiB on v7x, up to ~96 MiB on v5e/v6e).
    est = fixed + per_tk * tk
    cp_kwargs = {"dimension_semantics": ("arbitrary",)}
    if est > (30 << 20):
        cp_kwargs["vmem_limit_bytes"] = int(
            min(max(est * 5 // 4, 32 << 20), vmem_budget))

    kernel = functools.partial(
        _fused_netblock_kernel, nlayer=nlayer, acts=tuple(act_list))

    def run(in_specs):
        return pl.pallas_call(
            kernel,
            out_shape=jax.ShapeDtypeStruct((B, dout_pad), jnp.float32),
            grid=(kt,),
            in_specs=in_specs,
            out_specs=out_spec,
            scratch_shapes=[pltpu.VMEM((B, d1_pad), jnp.float32)],
            compiler_params=pltpu.CompilerParams(**cp_kwargs),
        )(*flat_inputs)

    try:
        out_pad = run(make_in_specs(True))
    except Exception:
        # Backend rejected Buffered(1); fall back to default double-buffering
        # (only costs a little VMEM on the small grid-invariant blocks).
        out_pad = run(make_in_specs(False))

    return out_pad[:, : dim_list[-1]]


def netblock_reference(x, params, dim_list, act_list):
    """Pure-JAX reference matching the kernel's numerics (bf16 layer 0)."""
    nlayer = len(params)
    h = x
    for i in range(nlayer):
        wt, gb = params[i]
        wt = wt[: dim_list[i], : dim_list[i + 1]]
        gamma = gb[0, : dim_list[i + 1]]
        beta = gb[1, : dim_list[i + 1]]
        if i == 0:
            h = jnp.dot(h.astype(jnp.bfloat16), wt,
                        preferred_element_type=jnp.float32)
        else:
            h = jnp.dot(h, wt.astype(jnp.float32),
                        preferred_element_type=jnp.float32)
        mean = jnp.mean(h, axis=0, keepdims=True)
        var = jnp.mean((h - mean) ** 2, axis=0, keepdims=True)
        h = (h - mean) * jax.lax.rsqrt(var + BN_EPS)
        h = h * gamma + beta
        h = _apply_act(h, act_list[i])
    return h


if __name__ == "__main__":
    # Small config implied by the module: nlayer layers of Linear+BN+act.
    nlayer = 2
    dim_list = [32, 64, 16]           # len == nlayer + 1
    act_list = ["relu", "sigmoid"]    # one activation per layer
    batch = 16
    # dropout_rate = noise_rate = 0.0 -> dropout layers are exactly identity.

    key = jax.random.PRNGKey(0)
    key, kx = jax.random.split(key)
    x = jax.random.normal(kx, (batch, dim_list[0]), dtype=jnp.float32)

    params = init_netblock_params(key, nlayer, dim_list)

    out = netblock_forward(x, params, dim_list, act_list)
    out = jax.block_until_ready(out)

    assert out.shape == (batch, dim_list[-1]), out.shape
    assert bool(jnp.all(jnp.isfinite(out)))

    ref = netblock_reference(x, params, dim_list, act_list)
    assert bool(jnp.allclose(out, ref, atol=2e-3, rtol=2e-3)), (
        float(jnp.max(jnp.abs(out - ref))))

    print("KERNEL_OK")
</pallas_src>

<mosaic_0001>
module attributes {stable_mosaic.version = 11 : i64} {
  func.func @_fused_netblock_kernel(%arg0: i32, %arg1: memref<16x128xbf16, #tpu.memory_space<vmem>>, %arg2: memref<128x128xbf16, #tpu.memory_space<vmem>>, %arg3: memref<2x128xf32, #tpu.memory_space<vmem>>, %arg4: memref<128x128xf32, #tpu.memory_space<vmem>>, %arg5: memref<2x128xf32, #tpu.memory_space<vmem>>, %arg6: memref<16x128xf32, #tpu.memory_space<vmem>>, %arg7: memref<16x128xf32, #tpu.memory_space<vmem>>) attributes {dimension_semantics = [#tpu.dimension_semantics<arbitrary>], iteration_bounds = array<i64: 1>, scalar_prefetch = 0 : i64, scratch_operands = 1 : i64, tpu.core_type = #tpu.core_type<tc>, window_params = [{transform_indices = @transform_0, window_bounds = array<i64: 16, 128>}, {transform_indices = @transform_1, window_bounds = array<i64: 128, 128>}, {pipeline_mode = #tpu.pipeline_mode<synchronous>, transform_indices = @transform_2, window_bounds = array<i64: 2, 128>}, {pipeline_mode = #tpu.pipeline_mode<synchronous>, transform_indices = @transform_3, window_bounds = array<i64: 128, 128>}, {pipeline_mode = #tpu.pipeline_mode<synchronous>, transform_indices = @transform_4, window_bounds = array<i64: 2, 128>}, {pipeline_mode = #tpu.pipeline_mode<synchronous>, transform_indices = @transform_5, window_bounds = array<i64: 16, 128>}]} {
    %c0_i32 = arith.constant 0 : i32
    %0 = arith.cmpi eq, %arg0, %c0_i32 : i32
    %1 = arith.extui %0 : i1 to i32
    %c0_i32_0 = arith.constant 0 : i32
    %2 = arith.cmpi ne, %1, %c0_i32_0 : i32
    scf.if %2 {
      %cst_10 = arith.constant 0.000000e+00 : f32
      %12 = vector.broadcast %cst_10 : f32 to vector<16x128xf32>
      %c0_11 = arith.constant 0 : index
      %c0_12 = arith.constant 0 : index
      %13 = vector.load %arg7[%c0_11, %c0_12] : memref<16x128xf32, #tpu.memory_space<vmem>>, vector<16x128xf32>
      tpu.vector_store %arg7[%c0_11, %c0_12], %12 {strides = array<i32>} : memref<16x128xf32, #tpu.memory_space<vmem>>, vector<16x128xf32>,
    } else {
    }
    %c0 = arith.constant 0 : index
    %c0_1 = arith.constant 0 : index
    %3 = vector.load %arg7[%c0, %c0_1] : memref<16x128xf32, #tpu.memory_space<vmem>>, vector<16x128xf32>
    %c0_2 = arith.constant 0 : index
    %c0_3 = arith.constant 0 : index
    %4 = vector.load %arg1[%c0_2, %c0_3] : memref<16x128xbf16, #tpu.memory_space<vmem>>, vector<16x128xbf16>
    %c0_4 = arith.constant 0 : index
    %c0_5 = arith.constant 0 : index
    %5 = vector.load %arg2[%c0_4, %c0_5] : memref<128x128xbf16, #tpu.memory_space<vmem>>, vector<128x128xbf16>
    %cst = arith.constant dense<0.000000e+00> : vector<16x128xf32>
    %6 = tpu.matmul %4, %5, %cst {dimension_numbers = #tpu.dot_dimension_numbers<[1], [0], [0], [1], [0, 0, 1, 1], [], []>} : vector<16x128xbf16>, vector<128x128xbf16>, vector<16x128xf32> -> vector<16x128xf32>
    %7 = arith.addf %3, %6 : vector<16x128xf32>
    %c0_6 = arith.constant 0 : index
    %c0_7 = arith.constant 0 : index
    %8 = vector.load %arg7[%c0_6, %c0_7] : memref<16x128xf32, #tpu.memory_space<vmem>>, vector<16x128xf32>
    tpu.vector_store %arg7[%c0_6, %c0_7], %7 {strides = array<i32>} : memref<16x128xf32, #tpu.memory_space<vmem>>, vector<16x128xf32>,
    %c0_i32_8 = arith.constant 0 : i32
    %9 = arith.cmpi eq, %arg0, %c0_i32_8 : i32
    %10 = arith.extui %9 : i1 to i32
    %c0_i32_9 = arith.constant 0 : i32
    %11 = arith.cmpi ne, %10, %c0_i32_9 : i32
    scf.if %11 {
      %c0_10 = arith.constant 0 : index
      %c0_11 = arith.constant 0 : index
      %12 = vector.load %arg7[%c0_10, %c0_11] : memref<16x128xf32, #tpu.memory_space<vmem>>, vector<16x128xf32>
      %c0_12 = arith.constant 0 : index
      %c0_13 = arith.constant 0 : index
      %13 = vector.load %arg3[%c0_12, %c0_13] : memref<2x128xf32, #tpu.memory_space<vmem>>, vector<2x128xf32>
      %14 = vector.extract_strided_slice %13 {offsets = [0, 0], sizes = [1, 128], strides = [1, 1]} : vector<2x128xf32> to vector<1x128xf32>
      %15 = vector.extract_strided_slice %13 {offsets = [1, 0], sizes = [1, 128], strides = [1, 1]} : vector<2x128xf32> to vector<1x128xf32>
      %cst_14 = arith.constant dense<0.000000e+00> : vector<128xf32>
      %16 = vector.multi_reduction <add>, %12, %cst_14 [0] : vector<16x128xf32> to vector<128xf32>
      %17 = vector.shape_cast %16 : vector<128xf32> to vector<1x128xf32>
      %cst_15 = arith.constant 1.600000e+01 : f32
      %18 = vector.broadcast %cst_15 : f32 to vector<1x128xf32>
      %19 = arith.divf %17, %18 : vector<1x128xf32>
      %20 = vector.broadcast %19 : vector<1x128xf32> to vector<16x128xf32>
      %21 = arith.subf %12, %20 : vector<16x128xf32>
      %22 = arith.mulf %21, %21 : vector<16x128xf32>
      %cst_16 = arith.constant dense<0.000000e+00> : vector<128xf32>
      %23 = vector.multi_reduction <add>, %22, %cst_16 [0] : vector<16x128xf32> to vector<128xf32>
      %24 = vector.shape_cast %23 : vector<128xf32> to vector<1x128xf32>
      %cst_17 = arith.constant 1.600000e+01 : f32
      %25 = vector.broadcast %cst_17 : f32 to vector<1x128xf32>
      %26 = arith.divf %24, %25 : vector<1x128xf32>
      %cst_18 = arith.constant 9.99999974E-6 : f32
      %27 = vector.broadcast %cst_18 : f32 to vector<1x128xf32>
      %28 = arith.addf %26, %27 : vector<1x128xf32>
      %29 = math.rsqrt %28 : vector<1x128xf32>
      %30 = vector.broadcast %29 : vector<1x128xf32> to vector<16x128xf32>
      %31 = arith.mulf %21, %30 : vector<16x128xf32>
      %32 = vector.broadcast %14 : vector<1x128xf32> to vector<16x128xf32>
      %33 = arith.mulf %31, %32 : vector<16x128xf32>
      %34 = vector.broadcast %15 : vector<1x128xf32> to vector<16x128xf32>
      %35 = arith.addf %33, %34 : vector<16x128xf32>
      %cst_19 = arith.constant 0.000000e+00 : f32
      %36 = vector.broadcast %cst_19 : f32 to vector<16x128xf32>
      %37 = arith.maximumf %35, %36 : vector<16x128xf32>
      %c0_20 = arith.constant 0 : index
      %c0_21 = arith.constant 0 : index
      %38 = vector.load %arg4[%c0_20, %c0_21] : memref<128x128xf32, #tpu.memory_space<vmem>>, vector<128x128xf32>
      %cst_22 = arith.constant dense<0.000000e+00> : vector<16x128xf32>
      %39 = tpu.matmul %37, %38, %cst_22 {dimension_numbers = #tpu.dot_dimension_numbers<[1], [0], [0], [1], [0, 0, 1, 1], [], []>} : vector<16x128xf32>, vector<128x128xf32>, vector<16x128xf32> -> vector<16x128xf32>
      %c0_23 = arith.constant 0 : index
      %c0_24 = arith.constant 0 : index
      %40 = vector.load %arg5[%c0_23, %c0_24] : memref<2x128xf32, #tpu.memory_space<vmem>>, vector<2x128xf32>
      %41 = vector.extract_strided_slice %40 {offsets = [0, 0], sizes = [1, 128], strides = [1, 1]} : vector<2x128xf32> to vector<1x128xf32>
      %42 = vector.extract_strided_slice %40 {offsets = [1, 0], sizes = [1, 128], strides = [1, 1]} : vector<2x128xf32> to vector<1x128xf32>
      %cst_25 = arith.constant dense<0.000000e+00> : vector<128xf32>
      %43 = vector.multi_reduction <add>, %39, %cst_25 [0] : vector<16x128xf32> to vector<128xf32>
      %44 = vector.shape_cast %43 : vector<128xf32> to vector<1x128xf32>
      %cst_26 = arith.constant 1.600000e+01 : f32
      %45 = vector.broadcast %cst_26 : f32 to vector<1x128xf32>
      %46 = arith.divf %44, %45 : vector<1x128xf32>
      %47 = vector.broadcast %46 : vector<1x128xf32> to vector<16x128xf32>
      %48 = arith.subf %39, %47 : vector<16x128xf32>
      %49 = arith.mulf %48, %48 : vector<16x128xf32>
      %cst_27 = arith.constant dense<0.000000e+00> : vector<128xf32>
      %50 = vector.multi_reduction <add>, %49, %cst_27 [0] : vector<16x128xf32> to vector<128xf32>
      %51 = vector.shape_cast %50 : vector<128xf32> to vector<1x128xf32>
      %cst_28 = arith.constant 1.600000e+01 : f32
      %52 = vector.broadcast %cst_28 : f32 to vector<1x128xf32>
      %53 = arith.divf %51, %52 : vector<1x128xf32>
      %cst_29 = arith.constant 9.99999974E-6 : f32
      %54 = vector.broadcast %cst_29 : f32 to vector<1x128xf32>
      %55 = arith.addf %53, %54 : vector<1x128xf32>
      %56 = math.rsqrt %55 : vector<1x128xf32>
      %57 = vector.broadcast %56 : vector<1x128xf32> to vector<16x128xf32>
      %58 = arith.mulf %48, %57 : vector<16x128xf32>
      %59 = vector.broadcast %41 : vector<1x128xf32> to vector<16x128xf32>
      %60 = arith.mulf %58, %59 : vector<16x128xf32>
      %61 = vector.broadcast %42 : vector<1x128xf32> to vector<16x128xf32>
      %62 = arith.addf %60, %61 : vector<16x128xf32>
      %63 = arith.negf %62 : vector<16x128xf32>
      %64 = math.exp %63 : vector<16x128xf32>
      %cst_30 = arith.constant 1.000000e+00 : f32
      %65 = vector.broadcast %cst_30 : f32 to vector<16x128xf32>
      %66 = arith.addf %65, %64 : vector<16x128xf32>
      %67 = arith.divf %65, %66 : vector<16x128xf32>
      %c0_31 = arith.constant 0 : index
      %c0_32 = arith.constant 0 : index
      %68 = vector.load %arg6[%c0_31, %c0_32] : memref<16x128xf32, #tpu.memory_space<vmem>>, vector<16x128xf32>
      tpu.vector_store %arg6[%c0_31, %c0_32], %67 {strides = array<i32>} : memref<16x128xf32, #tpu.memory_space<vmem>>, vector<16x128xf32>,
    } else {
    }
    return
  }
  func.func @transform_0(%arg0: i32) -> (i32, i32) {
    %c0_i32 = arith.constant 0 : i32
    %c0_i32_0 = arith.constant 0 : i32
    return %c0_i32, %arg0 : i32, i32
  }
  func.func @transform_1(%arg0: i32) -> (i32, i32) {
    %c0_i32 = arith.constant 0 : i32
    %c0_i32_0 = arith.constant 0 : i32
    return %arg0, %c0_i32 : i32, i32
  }
  func.func @transform_2(%arg0: i32) -> (i32, i32) {
    %c0_i32 = arith.constant 0 : i32
    %c0_i32_0 = arith.constant 0 : i32
    %c0_i32_1 = arith.constant 0 : i32
    return %c0_i32, %c0_i32_0 : i32, i32
  }
  func.func @transform_3(%arg0: i32) -> (i32, i32) {
    %c0_i32 = arith.constant 0 : i32
    %c0_i32_0 = arith.constant 0 : i32
    %c0_i32_1 = arith.constant 0 : i32
    return %c0_i32, %c0_i32_0 : i32, i32
  }
  func.func @transform_4(%arg0: i32) -> (i32, i32) {
    %c0_i32 = arith.constant 0 : i32
    %c0_i32_0 = arith.constant 0 : i32
    %c0_i32_1 = arith.constant 0 : i32
    return %c0_i32, %c0_i32_0 : i32, i32
  }
  func.func @transform_5(%arg0: i32) -> (i32, i32) {
    %c0_i32 = arith.constant 0 : i32
    %c0_i32_0 = arith.constant 0 : i32
    %c0_i32_1 = arith.constant 0 : i32
    return %c0_i32, %c0_i32_0 : i32, i32
  }
}

module attributes {stable_mosaic.version = 11 : i64} {
  func.func @_fused_netblock_kernel(%arg0: i32, %arg1: memref<16x128xbf16, #tpu.memory_space<vmem>>, %arg2: memref<128x128xbf16, #tpu.memory_space<vmem>>, %arg3: memref<2x128xf32, #tpu.memory_space<vmem>>, %arg4: memref<128x128xf32, #tpu.memory_space<vmem>>, %arg5: memref<2x128xf32, #tpu.memory_space<vmem>>, %arg6: memref<16x128xf32, #tpu.memory_space<vmem>>, %arg7: memref<16x128xf32, #tpu.memory_space<vmem>>) attributes {dimension_semantics = [#tpu.dimension_semantics<arbitrary>], iteration_bounds = array<i64: 1>, scalar_prefetch = 0 : i64, scratch_operands = 1 : i64, tpu.core_type = #tpu.core_type<tc>, window_params = [{transform_indices = @transform_0, window_bounds = array<i64: 16, 128>}, {transform_indices = @transform_1, window_bounds = array<i64: 128, 128>}, {pipeline_mode = #tpu.pipeline_mode<synchronous>, transform_indices = @transform_2, window_bounds = array<i64: 2, 128>}, {pipeline_mode = #tpu.pipeline_mode<synchronous>, transform_indices = @transform_3, window_bounds = array<i64: 128, 128>}, {pipeline_mode = #tpu.pipeline_mode<synchronous>, transform_indices = @transform_4, window_bounds = array<i64: 2, 128>}, {pipeline_mode = #tpu.pipeline_mode<synchronous>, transform_indices = @transform_5, window_bounds = array<i64: 16, 128>}]} {
    %c0_i32 = arith.constant 0 : i32
    %0 = arith.cmpi eq, %arg0, %c0_i32 : i32
    %1 = arith.extui %0 : i1 to i32
    %c0_i32_0 = arith.constant 0 : i32
    %2 = arith.cmpi ne, %1, %c0_i32_0 : i32
    scf.if %2 {
      %cst_10 = arith.constant 0.000000e+00 : f32
      %12 = vector.broadcast %cst_10 : f32 to vector<16x128xf32>
      %c0_11 = arith.constant 0 : index
      %c0_12 = arith.constant 0 : index
      %13 = vector.load %arg7[%c0_11, %c0_12] : memref<16x128xf32, #tpu.memory_space<vmem>>, vector<16x128xf32>
      tpu.vector_store %arg7[%c0_11, %c0_12], %12 {strides = array<i32>} : memref<16x128xf32, #tpu.memory_space<vmem>>, vector<16x128xf32>,
    } else {
    }
    %c0 = arith.constant 0 : index
    %c0_1 = arith.constant 0 : index
    %3 = vector.load %arg7[%c0, %c0_1] : memref<16x128xf32, #tpu.memory_space<vmem>>, vector<16x128xf32>
    %c0_2 = arith.constant 0 : index
    %c0_3 = arith.constant 0 : index
    %4 = vector.load %arg1[%c0_2, %c0_3] : memref<16x128xbf16, #tpu.memory_space<vmem>>, vector<16x128xbf16>
    %c0_4 = arith.constant 0 : index
    %c0_5 = arith.constant 0 : index
    %5 = vector.load %arg2[%c0_4, %c0_5] : memref<128x128xbf16, #tpu.memory_space<vmem>>, vector<128x128xbf16>
    %cst = arith.constant dense<0.000000e+00> : vector<16x128xf32>
    %6 = tpu.matmul %4, %5, %cst {dimension_numbers = #tpu.dot_dimension_numbers<[1], [0], [0], [1], [0, 0, 1, 1], [], []>} : vector<16x128xbf16>, vector<128x128xbf16>, vector<16x128xf32> -> vector<16x128xf32>
    %7 = arith.addf %3, %6 : vector<16x128xf32>
    %c0_6 = arith.constant 0 : index
    %c0_7 = arith.constant 0 : index
    %8 = vector.load %arg7[%c0_6, %c0_7] : memref<16x128xf32, #tpu.memory_space<vmem>>, vector<16x128xf32>
    tpu.vector_store %arg7[%c0_6, %c0_7], %7 {strides = array<i32>} : memref<16x128xf32, #tpu.memory_space<vmem>>, vector<16x128xf32>,
    %c0_i32_8 = arith.constant 0 : i32
    %9 = arith.cmpi eq, %arg0, %c0_i32_8 : i32
    %10 = arith.extui %9 : i1 to i32
    %c0_i32_9 = arith.constant 0 : i32
    %11 = arith.cmpi ne, %10, %c0_i32_9 : i32
    scf.if %11 {
      %c0_10 = arith.constant 0 : index
      %c0_11 = arith.constant 0 : index
      %12 = vector.load %arg7[%c0_10, %c0_11] : memref<16x128xf32, #tpu.memory_space<vmem>>, vector<16x128xf32>
      %c0_12 = arith.constant 0 : index
      %c0_13 = arith.constant 0 : index
      %13 = vector.load %arg3[%c0_12, %c0_13] : memref<2x128xf32, #tpu.memory_space<vmem>>, vector<2x128xf32>
      %14 = vector.extract_strided_slice %13 {offsets = [0, 0], sizes = [1, 128], strides = [1, 1]} : vector<2x128xf32> to vector<1x128xf32>
      %15 = vector.extract_strided_slice %13 {offsets = [1, 0], sizes = [1, 128], strides = [1, 1]} : vector<2x128xf32> to vector<1x128xf32>
      %cst_14 = arith.constant dense<0.000000e+00> : vector<128xf32>
      %16 = vector.multi_reduction <add>, %12, %cst_14 [0] : vector<16x128xf32> to vector<128xf32>
      %17 = vector.shape_cast %16 : vector<128xf32> to vector<1x128xf32>
      %cst_15 = arith.constant 1.600000e+01 : f32
      %18 = vector.broadcast %cst_15 : f32 to vector<1x128xf32>
      %19 = arith.divf %17, %18 : vector<1x128xf32>
      %20 = vector.broadcast %19 : vector<1x128xf32> to vector<16x128xf32>
      %21 = arith.subf %12, %20 : vector<16x128xf32>
      %22 = arith.mulf %21, %21 : vector<16x128xf32>
      %cst_16 = arith.constant dense<0.000000e+00> : vector<128xf32>
      %23 = vector.multi_reduction <add>, %22, %cst_16 [0] : vector<16x128xf32> to vector<128xf32>
      %24 = vector.shape_cast %23 : vector<128xf32> to vector<1x128xf32>
      %cst_17 = arith.constant 1.600000e+01 : f32
      %25 = vector.broadcast %cst_17 : f32 to vector<1x128xf32>
      %26 = arith.divf %24, %25 : vector<1x128xf32>
      %cst_18 = arith.constant 9.99999974E-6 : f32
      %27 = vector.broadcast %cst_18 : f32 to vector<1x128xf32>
      %28 = arith.addf %26, %27 : vector<1x128xf32>
      %29 = math.rsqrt %28 : vector<1x128xf32>
      %30 = vector.broadcast %29 : vector<1x128xf32> to vector<16x128xf32>
      %31 = arith.mulf %21, %30 : vector<16x128xf32>
      %32 = vector.broadcast %14 : vector<1x128xf32> to vector<16x128xf32>
      %33 = arith.mulf %31, %32 : vector<16x128xf32>
      %34 = vector.broadcast %15 : vector<1x128xf32> to vector<16x128xf32>
      %35 = arith.addf %33, %34 : vector<16x128xf32>
      %cst_19 = arith.constant 0.000000e+00 : f32
      %36 = vector.broadcast %cst_19 : f32 to vector<16x128xf32>
      %37 = arith.maximumf %35, %36 : vector<16x128xf32>
      %c0_20 = arith.constant 0 : index
      %c0_21 = arith.constant 0 : index
      %38 = vector.load %arg4[%c0_20, %c0_21] : memref<128x128xf32, #tpu.memory_space<vmem>>, vector<128x128xf32>
      %cst_22 = arith.constant dense<0.000000e+00> : vector<16x128xf32>
      %39 = tpu.matmul %37, %38, %cst_22 {dimension_numbers = #tpu.dot_dimension_numbers<[1], [0], [0], [1], [0, 0, 1, 1], [], []>} : vector<16x128xf32>, vector<128x128xf32>, vector<16x128xf32> -> vector<16x128xf32>
      %c0_23 = arith.constant 0 : index
      %c0_24 = arith.constant 0 : index
      %40 = vector.load %arg5[%c0_23, %c0_24] : memref<2x128xf32, #tpu.memory_space<vmem>>, vector<2x128xf32>
      %41 = vector.extract_strided_slice %40 {offsets = [0, 0], sizes = [1, 128], strides = [1, 1]} : vector<2x128xf32> to vector<1x128xf32>
      %42 = vector.extract_strided_slice %40 {offsets = [1, 0], sizes = [1, 128], strides = [1, 1]} : vector<2x128xf32> to vector<1x128xf32>
      %cst_25 = arith.constant dense<0.000000e+00> : vector<128xf32>
      %43 = vector.multi_reduction <add>, %39, %cst_25 [0] : vector<16x128xf32> to vector<128xf32>
      %44 = vector.shape_cast %43 : vector<128xf32> to vector<1x128xf32>
      %cst_26 = arith.constant 1.600000e+01 : f32
      %45 = vector.broadcast %cst_26 : f32 to vector<1x128xf32>
      %46 = arith.divf %44, %45 : vector<1x128xf32>
      %47 = vector.broadcast %46 : vector<1x128xf32> to vector<16x128xf32>
      %48 = arith.subf %39, %47 : vector<16x128xf32>
      %49 = arith.mulf %48, %48 : vector<16x128xf32>
      %cst_27 = arith.constant dense<0.000000e+00> : vector<128xf32>
      %50 = vector.multi_reduction <add>, %49, %cst_27 [0] : vector<16x128xf32> to vector<128xf32>
      %51 = vector.shape_cast %50 : vector<128xf32> to vector<1x128xf32>
      %cst_28 = arith.constant 1.600000e+01 : f32
      %52 = vector.broadcast %cst_28 : f32 to vector<1x128xf32>
      %53 = arith.divf %51, %52 : vector<1x128xf32>
      %cst_29 = arith.constant 9.99999974E-6 : f32
      %54 = vector.broadcast %cst_29 : f32 to vector<1x128xf32>
      %55 = arith.addf %53, %54 : vector<1x128xf32>
      %56 = math.rsqrt %55 : vector<1x128xf32>
      %57 = vector.broadcast %56 : vector<1x128xf32> to vector<16x128xf32>
      %58 = arith.mulf %48, %57 : vector<16x128xf32>
      %59 = vector.broadcast %41 : vector<1x128xf32> to vector<16x128xf32>
      %60 = arith.mulf %58, %59 : vector<16x128xf32>
      %61 = vector.broadcast %42 : vector<1x128xf32> to vector<16x128xf32>
      %62 = arith.addf %60, %61 : vector<16x128xf32>
      %63 = arith.negf %62 : vector<16x128xf32>
      %64 = math.exp %63 : vector<16x128xf32>
      %cst_30 = arith.constant 1.000000e+00 : f32
      %65 = vector.broadcast %cst_30 : f32 to vector<16x128xf32>
      %66 = arith.addf %65, %64 : vector<16x128xf32>
      %67 = arith.divf %65, %66 : vector<16x128xf32>
      %c0_31 = arith.constant 0 : index
      %c0_32 = arith.constant 0 : index
      %68 = vector.load %arg6[%c0_31, %c0_32] : memref<16x128xf32, #tpu.memory_space<vmem>>, vector<16x128xf32>
      tpu.vector_store %arg6[%c0_31, %c0_32], %67 {strides = array<i32>} : memref<16x128xf32, #tpu.memory_space<vmem>>, vector<16x128xf32>,
    } else {
    }
    return
  }
  func.func @transform_0(%arg0: i32) -> (i32, i32) {
    %c0_i32 = arith.constant 0 : i32
    %c0_i32_0 = arith.constant 0 : i32
    return %c0_i32, %arg0 : i32, i32
  }
  func.func @transform_1(%arg0: i32) -> (i32, i32) {
    %c0_i32 = arith.constant 0 : i32
    %c0_i32_0 = arith.constant 0 : i32
    return %arg0, %c0_i32 : i32, i32
  }
  func.func @transform_2(%arg0: i32) -> (i32, i32) {
    %c0_i32 = arith.constant 0 : i32
    %c0_i32_0 = arith.constant 0 : i32
    %c0_i32_1 = arith.constant 0 : i32
    return %c0_i32, %c0_i32_0 : i32, i32
  }
  func.func @transform_3(%arg0: i32) -> (i32, i32) {
    %c0_i32 = arith.constant 0 : i32
    %c0_i32_0 = arith.constant 0 : i32
    %c0_i32_1 = arith.constant 0 : i32
    return %c0_i32, %c0_i32_0 : i32, i32
  }
  func.func @transform_4(%arg0: i32) -> (i32, i32) {
    %c0_i32 = arith.constant 0 : i32
    %c0_i32_0 = arith.constant 0 : i32
    %c0_i32_1 = arith.constant 0 : i32
    return %c0_i32, %c0_i32_0 : i32, i32
  }
  func.func @transform_5(%arg0: i32) -> (i32, i32) {
    %c0_i32 = arith.constant 0 : i32
    %c0_i32_0 = arith.constant 0 : i32
    %c0_i32_1 = arith.constant 0 : i32
    return %c0_i32, %c0_i32_0 : i32, i32
  }
}

</mosaic_0001>

<llo_original>
// kernel: tpu_custom_call.1
$region0: #{tpu_custom_call.1}
  #allocation0 [shape = 'u32[]', space=smem, size = 0x4, offset = 0x4, fixed_abs, tag = 'smem constant byte address 0x4 - core index']
  #allocation1 [shape = 'u32[72,128]{1,0:T(1,128)}', space=vmem, size = 0x9000, scoped, tag = 'internal scratch']
  #allocation2 [shape = 'f32[16,128]{1,0:T(8,128)}', space=vmem, size = 0x2000, scoped, tag = 'scratch operand']
  %s0 = inlined_call_operand.hbm [shape: bf16[16,128], index: 0, kind: input, shape index: {}]
  %s1 = inlined_call_operand.hbm [shape: bf16[128,128], index: 1, kind: input, shape index: {}]
  %s2 = inlined_call_operand.hbm [shape: f32[2,128], index: 2, kind: input, shape index: {}]
  %s3 = inlined_call_operand.hbm [shape: f32[128,128], index: 3, kind: input, shape index: {}]
  %s4 = inlined_call_operand.vmem [shape: f32[2,128], index: 4, kind: input, shape index: {}]
  %s5 = inlined_call_operand.hbm [shape: f32[16,128], index: 5, kind: output, shape index: {}]
  %s6 = sld [smem:[#allocation0]]
  $region54: #{tpu_custom_call.1} parent=0
    _
  %s8 = ssub.s32 1, %s6
  %s9 = scalar_select 0, %s8, %s6
  $region1: #{tpu_custom_call.1} parent=0
    #allocation3 [shape = 'u8[4096]{0}', space=vmem, size = 0x1000, scoped, tag = 'input window, operand 0, single buffered']
    #allocation4 [shape = 's32[1]{0}', space=sflag, size = 0x4, scoped, tag = 'scoped memory for tpu_custom_call.1']
    #allocation5 [shape = 's32[1]{0}', space=sflag, size = 0x4, scoped, tag = 'scoped memory for tpu_custom_call.1']
    #allocation6 [shape = 'u8[32768]{0}', space=vmem, size = 0x8000, scoped, tag = 'input window, operand 1, single buffered']
    #allocation7 [shape = 's32[1]{0}', space=sflag, size = 0x4, scoped, tag = 'scoped memory for tpu_custom_call.1']
    #allocation8 [shape = 'u8[1024]{0}', space=vmem, size = 0x400, scoped, tag = 'input window, operand 2, single buffered']
    #allocation9 [shape = 'u8[65536]{0}', space=vmem, size = 0x10000, scoped, tag = 'input window, operand 3, single buffered']
    #allocation10 [shape = 's32[1]{0}', space=sflag, size = 0x4, scoped, tag = 'scoped memory for tpu_custom_call.1']
    #allocation11 [shape = 'u8[8192]{0}', space=vmem, size = 0x2000, scoped, tag = 'output window, operand 0, single buffered']
    %10 = vsyncpa [#allocation4], 0
    %11 = vsyncpa [#allocation7], 0
    %12 = vsyncpa [#allocation10], 0
    %13 = vsyncpa [#allocation5], 0
    // Predicated region
    $region2: #{tpu_custom_call.1} parent=1 // pred_check
      _
    $region3: #{tpu_custom_call.1} parent=1 // pred_check_branch
      %15 = sbr.rel (0) target = $region5
    $region4: #{tpu_custom_call.1} parent=1 // pred_region
      %17 = vsyncadd [#allocation4], 0
      %s18 = sshll.u32 %s0, 4
      %s19 = int_to_ptr.hbm [resolvable:$true] %s18
      %s20 = sshll.u32 [#allocation3], 4
      %s21 = int_to_ptr.vmem [resolvable:$true] %s20
      %26 = dma.hbm_to_vmem [thread:$0]  %s19, 128, %s21, [#allocation4], 64, 64, 4
    $region5: #{tpu_custom_call.1} parent=1 // pred_fallthru
      _
    // Predicated region
    $region6: #{tpu_custom_call.1} parent=1 // pred_check
      _
    $region7: #{tpu_custom_call.1} parent=1 // pred_check_branch
      %28 = sbr.rel (0) target = $region9
    $region8: #{tpu_custom_call.1} parent=1 // pred_region
      %30 = vsyncadd [#allocation7], 0
      %s31 = sshll.u32 %s1, 4
      %s32 = int_to_ptr.hbm [resolvable:$true] %s31
      %s33 = sshll.u32 [#allocation6], 4
      %s34 = int_to_ptr.vmem [resolvable:$true] %s33
      %39 = dma.hbm_to_vmem [thread:$0]  %s32, 1024, %s34, [#allocation7], 64, 64, 4
    $region9: #{tpu_custom_call.1} parent=1 // pred_fallthru
      _
    // Predicated region
    $region10: #{tpu_custom_call.1} parent=1 // pred_check
      _
    $region11: #{tpu_custom_call.1} parent=1 // pred_check_branch
      %41 = sbr.rel (0) target = $region13
    $region12: #{tpu_custom_call.1} parent=1 // pred_region
      %43 = vsyncadd [#allocation7], 0
      %s45 = sshll.u32 %s2, 4
      %s46 = int_to_ptr.hbm [resolvable:$true] %s45
      %s47 = sshll.u32 [#allocation8], 4
      %s48 = int_to_ptr.vmem [resolvable:$true] %s47
      %50 = dma.hbm_to_vmem [thread:$0]  %s46, 32, %s48, [#allocation7]
    $region13: #{tpu_custom_call.1} parent=1 // pred_fallthru
      _
    // Predicated region
    $region14: #{tpu_custom_call.1} parent=1 // pred_check
      _
    $region15: #{tpu_custom_call.1} parent=1 // pred_check_branch
      %52 = sbr.rel (0) target = $region17
    $region16: #{tpu_custom_call.1} parent=1 // pred_region
      %54 = vsyncadd [#allocation10], 0
      %s55 = sshll.u32 %s3, 4
      %s56 = int_to_ptr.hbm [resolvable:$true] %s55
      %s57 = sshll.u32 [#allocation9], 4
      %s58 = int_to_ptr.vmem [resolvable:$true] %s57
      %63 = dma.hbm_to_vmem [thread:$0]  %s56, 2048, %s58, [#allocation10], 128, 128, 8
    $region17: #{tpu_custom_call.1} parent=1 // pred_fallthru
      _
    // Predicated region
    $region18: #{tpu_custom_call.1} parent=1 // pred_check
      _
    $region19: #{tpu_custom_call.1} parent=1 // pred_check_branch
      %65 = sbr.rel (0) target = $region21
    $region20: #{tpu_custom_call.1} parent=1 // pred_region
      _
    $region21: #{tpu_custom_call.1} parent=1 // pred_fallthru
      _
    // Predicated region
    $region22: #{tpu_custom_call.1} parent=1 // pred_check
      _
    $region23: #{tpu_custom_call.1} parent=1 // pred_check_branch
      %67 = sbr.rel (0) target = $region25
    $region24: #{tpu_custom_call.1} parent=1 // pred_region
      %69 = dma.done [#allocation4], 128
    $region25: #{tpu_custom_call.1} parent=1 // pred_fallthru
      _
    // Predicated region
    $region26: #{tpu_custom_call.1} parent=1 // pred_check
      _
    $region27: #{tpu_custom_call.1} parent=1 // pred_check_branch
      %71 = sbr.rel (0) target = $region29
    $region28: #{tpu_custom_call.1} parent=1 // pred_region
      %73 = dma.done [#allocation7], 1024
    $region29: #{tpu_custom_call.1} parent=1 // pred_fallthru
      _
    // Predicated region
    $region30: #{tpu_custom_call.1} parent=1 // pred_check
      _
    $region31: #{tpu_custom_call.1} parent=1 // pred_check_branch
      %75 = sbr.rel (0) target = $region33
    $region32: #{tpu_custom_call.1} parent=1 // pred_region
      %77 = dma.done [#allocation7], 32
    $region33: #{tpu_custom_call.1} parent=1 // pred_fallthru
      _
    // Predicated region
    $region34: #{tpu_custom_call.1} parent=1 // pred_check
      _
    $region35: #{tpu_custom_call.1} parent=1 // pred_check_branch
      %79 = sbr.rel (0) target = $region37
    $region36: #{tpu_custom_call.1} parent=1 // pred_region
      %81 = dma.done [#allocation10], 2048
    $region37: #{tpu_custom_call.1} parent=1 // pred_fallthru
      _
    %p82 = scmp.eq.s32.totalorder 0, 0
    // Predicated region
    $region38: #{tpu_custom_call.1} parent=1 // pred_check
      %p83 = pneg %p82
    $region39: #{tpu_custom_call.1} parent=1 // pred_check_branch
      %85 = sbr.rel (%p83) target = $region41
    $region40: #{tpu_custom_call.1} parent=1 // pred_region
      %86 = vst [vmem:[#allocation2] sm:$0xff] 0.0
      %87 = vst [vmem:[#allocation2 + $0x8] sm:$0xff] 0.0
    $region41: #{tpu_custom_call.1} parent=1 // pred_fallthru
      _
    %v88 = vld [vmem:[#allocation2] sm:$0xff]
    %v89 = vld [vmem:[#allocation2 + $0x8] sm:$0xff]
    %v90 = vld [vmem:[#allocation3] sm:$0xf]
    %v91 = vld [vmem:[#allocation3 + $0x4] sm:$0xf]
    %v92 = vld [vmem:[#allocation6] sm:$0xf]
    %v93 = vld [vmem:[#allocation6 + $0x4] sm:$0xf]
    %v94 = vld [vmem:[#allocation6 + $0x8] sm:$0xf]
    %v95 = vld [vmem:[#allocation6 + $0xc] sm:$0xf]
    %v96 = vld [vmem:[#allocation6 + $0x10] sm:$0xf]
    %v97 = vld [vmem:[#allocation6 + $0x14] sm:$0xf]
    %v98 = vld [vmem:[#allocation6 + $0x18] sm:$0xf]
    %v99 = vld [vmem:[#allocation6 + $0x1c] sm:$0xf]
    %v100 = vld [vmem:[#allocation6 + $0x20] sm:$0xf]
    %v101 = vld [vmem:[#allocation6 + $0x24] sm:$0xf]
    %v102 = vld [vmem:[#allocation6 + $0x28] sm:$0xf]
    %v103 = vld [vmem:[#allocation6 + $0x2c] sm:$0xf]
    %v104 = vld [vmem:[#allocation6 + $0x30] sm:$0xf]
    %v105 = vld [vmem:[#allocation6 + $0x34] sm:$0xf]
    %v106 = vld [vmem:[#allocation6 + $0x38] sm:$0xf]
    %v107 = vld [vmem:[#allocation6 + $0x3c] sm:$0xf]
    %v110 = vunpack.c.l.b16 %v90
    %v111 = vunpack.c.l.b16 %v91
    %v112 = vpack.c.b16 %v111, %v110
    %v130 = vunpack.c.l.b16 %v92
    %v131 = vunpack.c.l.b16 %v93
    %v132 = vunpack.c.l.b16 %v94
    %v133 = vunpack.c.l.b16 %v95
    %v134 = vunpack.c.l.b16 %v96
    %v135 = vunpack.c.l.b16 %v97
    %v136 = vunpack.c.l.b16 %v98
    %v137 = vunpack.c.l.b16 %v99
    %v138 = vunpack.c.l.b16 %v100
    %v139 = vunpack.c.l.b16 %v101
    %v140 = vunpack.c.l.b16 %v102
    %v141 = vunpack.c.l.b16 %v103
    %v142 = vunpack.c.l.b16 %v104
    %v143 = vunpack.c.l.b16 %v105
    %v144 = vunpack.c.l.b16 %v106
    %v145 = vunpack.c.l.b16 %v107
    %v146 = vpack.c.b16 %v131, %v130
    %v147 = vpack.c.b16 %v133, %v132
    %v148 = vpack.c.b16 %v135, %v134
    %v149 = vpack.c.b16 %v137, %v136
    %v150 = vpack.c.b16 %v139, %v138
    %v151 = vpack.c.b16 %v141, %v140
    %v152 = vpack.c.b16 %v143, %v142
    %v153 = vpack.c.b16 %v145, %v144
    %162 = vmatpush.bf16.msra.mxu0 %v153
    %163 = vmatpush.bf16.msra.mxu0 %v152
    %164 = vmatpush.bf16.msra.mxu0 %v151
    %165 = vmatpush.bf16.msra.mxu0 %v150
    %166 = vmatpush.bf16.msra.mxu0 %v149
    %167 = vmatpush.bf16.msra.mxu0 %v148
    %168 = vmatpush.bf16.msra.mxu0 %v147
    %169 = vmatpush.bf16.msra.mxu0 %v146
    %170 = vmatmul.bf16.gmra.mxu0 %v112
    %v171 = vpop.f32.mrf.mxu0
    %v172 = vadd.f32 0.0, %v171
    %v173 = vpop.f32.mrf.mxu0
    %v174 = vadd.f32 0.0, %v173
    %175 = vdwg.mxu0
    %v176 = vadd.f32 %v88, %v172
    %v177 = vadd.f32 %v89, %v174
    %178 = vst [vmem:[#allocation2] sm:$0xff] %v176
    %179 = vst [vmem:[#allocation2 + $0x8] sm:$0xff] %v177
    // Predicated region
    $region42: #{tpu_custom_call.1} parent=1 // pred_check
      %p180 = pneg %p82
    $region43: #{tpu_custom_call.1} parent=1 // pred_check_branch
      %182 = sbr.rel (%p180) target = $region45
    $region44: #{tpu_custom_call.1} parent=1 // pred_region
      %v183 = vld [vmem:[#allocation2] sm:$0xff]
      %v184 = vld [vmem:[#allocation2 + $0x8] sm:$0xff]
      %v185 = vld [vmem:[#allocation8] sm:$0x3]
      %v186 = vadd.f32 %v183, %v184
      %v187 = vrot.slane %v186, 4
      %v188 = vadd.f32 %v186, %v187
      %v189 = vrot.slane %v188, 2
      %v190 = vadd.f32 %v188, %v189
      %v191 = vrot.slane %v190, 1
      %v192 = vadd.f32 %v190, %v191
      %v193 = vrcp.pop 16.0
      %v194 = vmul.f32 16.0, %v193
      %v195 = vsub.f32 1.0, %v194
      %v196 = vmul.f32 %v193, %v195
      %v197 = vadd.f32 %v193, %v196
      %vm198 = vweird.f32 %v193
      %v199 = vsel %vm198, %v193, %v197
      %v200 = vmul.f32 %v192, %v199
      %v201 = vsub.f32 %v183, %v200
      %v202 = vsub.f32 %v184, %v200
      %v203 = vmul.f32 %v201, %v201
      %v204 = vmul.f32 %v202, %v202
      %v205 = vadd.f32 %v203, %v204
      %v206 = vrot.slane %v205, 4
      %v207 = vadd.f32 %v205, %v206
      %v208 = vrot.slane %v207, 2
      %v209 = vadd.f32 %v207, %v208
      %v210 = vrot.slane %v209, 1
      %v211 = vadd.f32 %v209, %v210
      %v212 = vmul.f32 %v211, %v199
      %v213 = vadd.f32 %v212, 1e-05
      %v214 = vrsqrt.pop %v213
      %v215 = vmul.f32 %v214, %v213
      %v216 = vmul.f32 %v215, %v214
      %v217 = vmul.f32 0.5, %v216
      %v218 = vsub.f32 1.5, %v217
      %v219 = vmul.f32 %v214, %v218
      %vm220 = vweird.f32 %v213
      %vm221 = vweird.f32 %v214
      %vm222 = vmor %vm220, %vm221
      %v223 = vsel %vm222, %v214, %v219
      %v224 = vmul.f32 %v201, %v223
      %v225 = vmul.f32 %v202, %v223
      %v226 = vperm.slane %v185, 0
      %v227 = vmul.f32 %v224, %v226
      %v228 = vmul.f32 %v225, %v226
      %v229 = vperm.slane %v185, 1
      %v230 = vadd.f32 %v227, %v229
      %v231 = vadd.f32 %v228, %v229
      %v232 = vmax.f32 %v230, 0.0
      %v233 = vmax.f32 %v231, 0.0
      %v234 = vld [vmem:[#allocation9] sm:$0xff]
      %v235 = vld [vmem:[#allocation9 + $0x8] sm:$0xff]
      %v236 = vld [vmem:[#allocation9 + $0x10] sm:$0xff]
      %v237 = vld [vmem:[#allocation9 + $0x18] sm:$0xff]
      %v238 = vld [vmem:[#allocation9 + $0x20] sm:$0xff]
      %v239 = vld [vmem:[#allocation9 + $0x28] sm:$0xff]
      %v240 = vld [vmem:[#allocation9 + $0x30] sm:$0xff]
      %v241 = vld [vmem:[#allocation9 + $0x38] sm:$0xff]
      %v242 = vld [vmem:[#allocation9 + $0x40] sm:$0xff]
      %v243 = vld [vmem:[#allocation9 + $0x48] sm:$0xff]
      %v244 = vld [vmem:[#allocation9 + $0x50] sm:$0xff]
      %v245 = vld [vmem:[#allocation9 + $0x58] sm:$0xff]
      %v246 = vld [vmem:[#allocation9 + $0x60] sm:$0xff]
      %v247 = vld [vmem:[#allocation9 + $0x68] sm:$0xff]
      %v248 = vld [vmem:[#allocation9 + $0x70] sm:$0xff]
      %v249 = vld [vmem:[#allocation9 + $0x78] sm:$0xff]
      %250 = vmatpush.msra.mxu0 %v249
      %251 = vmatpush.msra.mxu0 %v248
      %252 = vmatpush.msra.mxu0 %v247
      %253 = vmatpush.msra.mxu0 %v246
      %254 = vmatpush.msra.mxu0 %v245
      %255 = vmatpush.msra.mxu0 %v244
      %256 = vmatpush.msra.mxu0 %v243
      %257 = vmatpush.msra.mxu0 %v242
      %258 = vmatpush.msra.mxu0 %v241
      %259 = vmatpush.msra.mxu0 %v240
      %260 = vmatpush.msra.mxu0 %v239
      %261 = vmatpush.msra.mxu0 %v238
      %262 = vmatpush.msra.mxu0 %v237
      %263 = vmatpush.msra.mxu0 %v236
      %264 = vmatpush.msra.mxu0 %v235
      %265 = vmatpush.msra.mxu0 %v234
      %266 = vmatmul.f32.gmra.mxu0 %v232
      %v267 = vpop.f32.mrf.mxu0
      %v268 = vadd.f32 0.0, %v267
      %269 = vmatmul.f32.gmra.mxu0 %v233
      %v270 = vpop.f32.mrf.mxu0
      %v271 = vadd.f32 0.0, %v270
      %272 = vdwg.mxu0
      %v273 = vld [vmem:[%s4] sm:$0x3]
      %v274 = vadd.f32 %v268, %v271
      %v275 = vrot.slane %v274, 4
      %v276 = vadd.f32 %v274, %v275
      %v277 = vrot.slane %v276, 2
      %v278 = vadd.f32 %v276, %v277
      %v279 = vrot.slane %v278, 1
      %v280 = vadd.f32 %v278, %v279
      %v281 = vmul.f32 %v280, %v199
      %v282 = vsub.f32 %v268, %v281
      %v283 = vsub.f32 %v271, %v281
      %v284 = vmul.f32 %v282, %v282
      %v285 = vmul.f32 %v283, %v283
      %v286 = vadd.f32 %v284, %v285
      %v287 = vrot.slane %v286, 4
      %v288 = vadd.f32 %v286, %v287
      %v289 = vrot.slane %v288, 2
      %v290 = vadd.f32 %v288, %v289
      %v291 = vrot.slane %v290, 1
      %v292 = vadd.f32 %v290, %v291
      %v293 = vmul.f32 %v292, %v199
      %v294 = vadd.f32 %v293, 1e-05
      %v295 = vrsqrt.pop %v294
      %v296 = vmul.f32 %v295, %v294
      %v297 = vmul.f32 %v296, %v295
      %v298 = vmul.f32 0.5, %v297
      %v299 = vsub.f32 1.5, %v298
      %v300 = vmul.f32 %v295, %v299
      %vm301 = vweird.f32 %v294
      %vm302 = vweird.f32 %v295
      %vm303 = vmor %vm301, %vm302
      %v304 = vsel %vm303, %v295, %v300
      %v305 = vmul.f32 %v282, %v304
      %v306 = vmul.f32 %v283, %v304
      %v307 = vperm.slane %v273, 0
      %v308 = vmul.f32 %v305, %v307
      %v309 = vmul.f32 %v306, %v307
      %v310 = vperm.slane %v273, 1
      %v311 = vadd.f32 %v308, %v310
      %v312 = vadd.f32 %v309, %v310
      %v313 = vxor.u32 %v311, 2147483648
      %v314 = vxor.u32 %v312, 2147483648
      %v315 = vmul.f32 %v313, 1.442695
      %v316 = vpow.pop %v315
      %v317 = vmul.f32 %v314, 1.442695
      %v318 = vpow.pop %v317
      %v319 = vadd.f32 %v316, 1.0
      %v320 = vadd.f32 %v318, 1.0
      %v321 = vrcp.pop %v319
      %v322 = vmul.f32 %v319, %v321
      %v323 = vsub.f32 1.0, %v322
      %v324 = vmul.f32 %v321, %v323
      %v325 = vadd.f32 %v321, %v324
      %vm326 = vweird.f32 %v319
      %vm327 = vweird.f32 %v321
      %vm328 = vmor %vm326, %vm327
      %v329 = vsel %vm328, %v321, %v325
      %v330 = vand.u32 2147483647, %v319
      %vm331 = vcmp.eq.f32.partialorder %v330, 8.507059e+37
      %v332 = vand.u32 %v319, 2147483648
      %v333 = vor.u32 1.1754944e-38, %v332
      %v334 = vsel %vm331, %v333, %v329
      %v335 = vmul.f32 1.0, %v334
      %v336 = vrcp.pop %v320
      %v337 = vmul.f32 %v320, %v336
      %v338 = vsub.f32 1.0, %v337
      %v339 = vmul.f32 %v336, %v338
      %v340 = vadd.f32 %v336, %v339
      %vm341 = vweird.f32 %v320
      %vm342 = vweird.f32 %v336
      %vm343 = vmor %vm341, %vm342
      %v344 = vsel %vm343, %v336, %v340
      %v345 = vand.u32 2147483647, %v320
      %vm346 = vcmp.eq.f32.partialorder %v345, 8.507059e+37
      %v347 = vand.u32 %v320, 2147483648
      %v348 = vor.u32 1.1754944e-38, %v347
      %v349 = vsel %vm346, %v348, %v344
      %v350 = vmul.f32 1.0, %v349
      %351 = vst [vmem:[#allocation11] sm:$0xff] %v335
      %352 = vst [vmem:[#allocation11 + $0x8] sm:$0xff] %v350
    $region45: #{tpu_custom_call.1} parent=1 // pred_fallthru
      _
    // Predicated region
    $region46: #{tpu_custom_call.1} parent=1 // pred_check
      _
    $region47: #{tpu_custom_call.1} parent=1 // pred_check_branch
      %354 = sbr.rel (0) target = $region49
    $region48: #{tpu_custom_call.1} parent=1 // pred_region
      %356 = vsyncadd [#allocation5], 0
      %s357 = sshll.u32 [#allocation11], 4
      %s358 = int_to_ptr.vmem [resolvable:$true] %s357
      %s359 = sshll.u32 %s5, 4
      %s360 = int_to_ptr.hbm [resolvable:$true] %s359
      %365 = dma.vmem_to_hbm [thread:$0]  %s358, 256, %s360, [#allocation5], 128, 128, 8
    $region49: #{tpu_custom_call.1} parent=1 // pred_fallthru
      _
    // Predicated region
    $region50: #{tpu_custom_call.1} parent=1 // pred_check
      _
    $region51: #{tpu_custom_call.1} parent=1 // pred_check_branch
      %367 = sbr.rel (0) target = $region53
    $region52: #{tpu_custom_call.1} parent=1 // pred_region
      %369 = dma.done [#allocation5], 256
    $region53: #{tpu_custom_call.1} parent=1 // pred_fallthru
      _
    %370 = vsyncpa [#allocation4], 1
    %371 = vsyncpa [#allocation7], 1
    %372 = vsyncpa [#allocation10], 1
    %373 = vsyncpa [#allocation5], 1

// kernel: tpu_custom_call.1
$region0: #{tpu_custom_call.1}
  #allocation0 [shape = 'u32[]', space=smem, size = 0x4, offset = 0x4, fixed_abs, tag = 'smem constant byte address 0x4 - core index']
  #allocation1 [shape = 'u32[72,128]{1,0:T(1,128)}', space=vmem, size = 0x9000, scoped, tag = 'internal scratch']
  #allocation2 [shape = 'f32[16,128]{1,0:T(8,128)}', space=vmem, size = 0x2000, scoped, tag = 'scratch operand']
  %s0 = inlined_call_operand.hbm [shape: bf16[16,128], index: 0, kind: input, shape index: {}]
  %s1 = inlined_call_operand.hbm [shape: bf16[128,128], index: 1, kind: input, shape index: {}]
  %s2 = inlined_call_operand.hbm [shape: f32[2,128], index: 2, kind: input, shape index: {}]
  %s3 = inlined_call_operand.hbm [shape: f32[128,128], index: 3, kind: input, shape index: {}]
  %s4 = inlined_call_operand.vmem [shape: f32[2,128], index: 4, kind: input, shape index: {}]
  %s5 = inlined_call_operand.hbm [shape: f32[16,128], index: 5, kind: output, shape index: {}]
  %s6 = sld [smem:[#allocation0]]
  $region54: #{tpu_custom_call.1} parent=0
    _
  %s8 = ssub.s32 1, %s6
  %s9 = scalar_select 0, %s8, %s6
  $region1: #{tpu_custom_call.1} parent=0
    #allocation3 [shape = 'u8[4096]{0}', space=vmem, size = 0x1000, scoped, tag = 'input window, operand 0, single buffered']
    #allocation4 [shape = 's32[1]{0}', space=sflag, size = 0x4, scoped, tag = 'scoped memory for tpu_custom_call.1']
    #allocation5 [shape = 's32[1]{0}', space=sflag, size = 0x4, scoped, tag = 'scoped memory for tpu_custom_call.1']
    #allocation6 [shape = 'u8[32768]{0}', space=vmem, size = 0x8000, scoped, tag = 'input window, operand 1, single buffered']
    #allocation7 [shape = 's32[1]{0}', space=sflag, size = 0x4, scoped, tag = 'scoped memory for tpu_custom_call.1']
    #allocation8 [shape = 'u8[1024]{0}', space=vmem, size = 0x400, scoped, tag = 'input window, operand 2, single buffered']
    #allocation9 [shape = 'u8[65536]{0}', space=vmem, size = 0x10000, scoped, tag = 'input window, operand 3, single buffered']
    #allocation10 [shape = 's32[1]{0}', space=sflag, size = 0x4, scoped, tag = 'scoped memory for tpu_custom_call.1']
    #allocation11 [shape = 'u8[8192]{0}', space=vmem, size = 0x2000, scoped, tag = 'output window, operand 0, single buffered']
    %10 = vsyncpa [#allocation4], 0
    %11 = vsyncpa [#allocation7], 0
    %12 = vsyncpa [#allocation10], 0
    %13 = vsyncpa [#allocation5], 0
    // Predicated region
    $region2: #{tpu_custom_call.1} parent=1 // pred_check
      _
    $region3: #{tpu_custom_call.1} parent=1 // pred_check_branch
      %15 = sbr.rel (0) target = $region5
    $region4: #{tpu_custom_call.1} parent=1 // pred_region
      %17 = vsyncadd [#allocation4], 0
      %s18 = sshll.u32 %s0, 4
      %s19 = int_to_ptr.hbm [resolvable:$true] %s18
      %s20 = sshll.u32 [#allocation3], 4
      %s21 = int_to_ptr.vmem [resolvable:$true] %s20
      %26 = dma.hbm_to_vmem [thread:$0]  %s19, 128, %s21, [#allocation4], 64, 64, 4
    $region5: #{tpu_custom_call.1} parent=1 // pred_fallthru
      _
    // Predicated region
    $region6: #{tpu_custom_call.1} parent=1 // pred_check
      _
    $region7: #{tpu_custom_call.1} parent=1 // pred_check_branch
      %28 = sbr.rel (0) target = $region9
    $region8: #{tpu_custom_call.1} parent=1 // pred_region
      %30 = vsyncadd [#allocation7], 0
      %s31 = sshll.u32 %s1, 4
      %s32 = int_to_ptr.hbm [resolvable:$true] %s31
      %s33 = sshll.u32 [#allocation6], 4
      %s34 = int_to_ptr.vmem [resolvable:$true] %s33
      %39 = dma.hbm_to_vmem [thread:$0]  %s32, 1024, %s34, [#allocation7], 64, 64, 4
    $region9: #{tpu_custom_call.1} parent=1 // pred_fallthru
      _
    // Predicated region
    $region10: #{tpu_custom_call.1} parent=1 // pred_check
      _
    $region11: #{tpu_custom_call.1} parent=1 // pred_check_branch
      %41 = sbr.rel (0) target = $region13
    $region12: #{tpu_custom_call.1} parent=1 // pred_region
      %43 = vsyncadd [#allocation7], 0
      %s45 = sshll.u32 %s2, 4
      %s46 = int_to_ptr.hbm [resolvable:$true] %s45
      %s47 = sshll.u32 [#allocation8], 4
      %s48 = int_to_ptr.vmem [resolvable:$true] %s47
      %50 = dma.hbm_to_vmem [thread:$0]  %s46, 32, %s48, [#allocation7]
    $region13: #{tpu_custom_call.1} parent=1 // pred_fallthru
      _
    // Predicated region
    $region14: #{tpu_custom_call.1} parent=1 // pred_check
      _
    $region15: #{tpu_custom_call.1} parent=1 // pred_check_branch
      %52 = sbr.rel (0) target = $region17
    $region16: #{tpu_custom_call.1} parent=1 // pred_region
      %54 = vsyncadd [#allocation10], 0
      %s55 = sshll.u32 %s3, 4
      %s56 = int_to_ptr.hbm [resolvable:$true] %s55
      %s57 = sshll.u32 [#allocation9], 4
      %s58 = int_to_ptr.vmem [resolvable:$true] %s57
      %63 = dma.hbm_to_vmem [thread:$0]  %s56, 2048, %s58, [#allocation10], 128, 128, 8
    $region17: #{tpu_custom_call.1} parent=1 // pred_fallthru
      _
    // Predicated region
    $region18: #{tpu_custom_call.1} parent=1 // pred_check
      _
    $region19: #{tpu_custom_call.1} parent=1 // pred_check_branch
      %65 = sbr.rel (0) target = $region21
    $region20: #{tpu_custom_call.1} parent=1 // pred_region
      _
    $region21: #{tpu_custom_call.1} parent=1 // pred_fallthru
      _
    // Predicated region
    $region22: #{tpu_custom_call.1} parent=1 // pred_check
      _
    $region23: #{tpu_custom_call.1} parent=1 // pred_check_branch
      %67 = sbr.rel (0) target = $region25
    $region24: #{tpu_custom_call.1} parent=1 // pred_region
      %69 = dma.done [#allocation4], 128
    $region25: #{tpu_custom_call.1} parent=1 // pred_fallthru
      _
    // Predicated region
    $region26: #{tpu_custom_call.1} parent=1 // pred_check
      _
    $region27: #{tpu_custom_call.1} parent=1 // pred_check_branch
      %71 = sbr.rel (0) target = $region29
    $region28: #{tpu_custom_call.1} parent=1 // pred_region
      %73 = dma.done [#allocation7], 1024
    $region29: #{tpu_custom_call.1} parent=1 // pred_fallthru
      _
    // Predicated region
    $region30: #{tpu_custom_call.1} parent=1 // pred_check
      _
    $region31: #{tpu_custom_call.1} parent=1 // pred_check_branch
      %75 = sbr.rel (0) target = $region33
    $region32: #{tpu_custom_call.1} parent=1 // pred_region
      %77 = dma.done [#allocation7], 32
    $region33: #{tpu_custom_call.1} parent=1 // pred_fallthru
      _
    // Predicated region
    $region34: #{tpu_custom_call.1} parent=1 // pred_check
      _
    $region35: #{tpu_custom_call.1} parent=1 // pred_check_branch
      %79 = sbr.rel (0) target = $region37
    $region36: #{tpu_custom_call.1} parent=1 // pred_region
      %81 = dma.done [#allocation10], 2048
    $region37: #{tpu_custom_call.1} parent=1 // pred_fallthru
      _
    %p82 = scmp.eq.s32.totalorder 0, 0
    // Predicated region
    $region38: #{tpu_custom_call.1} parent=1 // pred_check
      %p83 = pneg %p82
    $region39: #{tpu_custom_call.1} parent=1 // pred_check_branch
      %85 = sbr.rel (%p83) target = $region41
    $region40: #{tpu_custom_call.1} parent=1 // pred_region
      %86 = vst [vmem:[#allocation2] sm:$0xff] 0.0
      %87 = vst [vmem:[#allocation2 + $0x8] sm:$0xff] 0.0
    $region41: #{tpu_custom_call.1} parent=1 // pred_fallthru
      _
    %v88 = vld [vmem:[#allocation2] sm:$0xff]
    %v89 = vld [vmem:[#allocation2 + $0x8] sm:$0xff]
    %v90 = vld [vmem:[#allocation3] sm:$0xf]
    %v91 = vld [vmem:[#allocation3 + $0x4] sm:$0xf]
    %v92 = vld [vmem:[#allocation6] sm:$0xf]
    %v93 = vld [vmem:[#allocation6 + $0x4] sm:$0xf]
    %v94 = vld [vmem:[#allocation6 + $0x8] sm:$0xf]
    %v95 = vld [vmem:[#allocation6 + $0xc] sm:$0xf]
    %v96 = vld [vmem:[#allocation6 + $0x10] sm:$0xf]
    %v97 = vld [vmem:[#allocation6 + $0x14] sm:$0xf]
    %v98 = vld [vmem:[#allocation6 + $0x18] sm:$0xf]
    %v99 = vld [vmem:[#allocation6 + $0x1c] sm:$0xf]
    %v100 = vld [vmem:[#allocation6 + $0x20] sm:$0xf]
    %v101 = vld [vmem:[#allocation6 + $0x24] sm:$0xf]
    %v102 = vld [vmem:[#allocation6 + $0x28] sm:$0xf]
    %v103 = vld [vmem:[#allocation6 + $0x2c] sm:$0xf]
    %v104 = vld [vmem:[#allocation6 + $0x30] sm:$0xf]
    %v105 = vld [vmem:[#allocation6 + $0x34] sm:$0xf]
    %v106 = vld [vmem:[#allocation6 + $0x38] sm:$0xf]
    %v107 = vld [vmem:[#allocation6 + $0x3c] sm:$0xf]
    %v110 = vunpack.c.l.b16 %v90
    %v111 = vunpack.c.l.b16 %v91
    %v112 = vpack.c.b16 %v111, %v110
    %v130 = vunpack.c.l.b16 %v92
    %v131 = vunpack.c.l.b16 %v93
    %v132 = vunpack.c.l.b16 %v94
    %v133 = vunpack.c.l.b16 %v95
    %v134 = vunpack.c.l.b16 %v96
    %v135 = vunpack.c.l.b16 %v97
    %v136 = vunpack.c.l.b16 %v98
    %v137 = vunpack.c.l.b16 %v99
    %v138 = vunpack.c.l.b16 %v100
    %v139 = vunpack.c.l.b16 %v101
    %v140 = vunpack.c.l.b16 %v102
    %v141 = vunpack.c.l.b16 %v103
    %v142 = vunpack.c.l.b16 %v104
    %v143 = vunpack.c.l.b16 %v105
    %v144 = vunpack.c.l.b16 %v106
    %v145 = vunpack.c.l.b16 %v107
    %v146 = vpack.c.b16 %v131, %v130
    %v147 = vpack.c.b16 %v133, %v132
    %v148 = vpack.c.b16 %v135, %v134
    %v149 = vpack.c.b16 %v137, %v136
    %v150 = vpack.c.b16 %v139, %v138
    %v151 = vpack.c.b16 %v141, %v140
    %v152 = vpack.c.b16 %v143, %v142
    %v153 = vpack.c.b16 %v145, %v144
    %162 = vmatpush.bf16.msra.mxu0 %v153
    %163 = vmatpush.bf16.msra.mxu0 %v152
    %164 = vmatpush.bf16.msra.mxu0 %v151
    %165 = vmatpush.bf16.msra.mxu0 %v150
    %166 = vmatpush.bf16.msra.mxu0 %v149
    %167 = vmatpush.bf16.msra.mxu0 %v148
    %168 = vmatpush.bf16.msra.mxu0 %v147
    %169 = vmatpush.bf16.msra.mxu0 %v146
    %170 = vmatmul.bf16.gmra.mxu0 %v112
    %v171 = vpop.f32.mrf.mxu0
    %v172 = vadd.f32 0.0, %v171
    %v173 = vpop.f32.mrf.mxu0
    %v174 = vadd.f32 0.0, %v173
    %175 = vdwg.mxu0
    %v176 = vadd.f32 %v88, %v172
    %v177 = vadd.f32 %v89, %v174
    %178 = vst [vmem:[#allocation2] sm:$0xff] %v176
    %179 = vst [vmem:[#allocation2 + $0x8] sm:$0xff] %v177
    // Predicated region
    $region42: #{tpu_custom_call.1} parent=1 // pred_check
      %p180 = pneg %p82
    $region43: #{tpu_custom_call.1} parent=1 // pred_check_branch
      %182 = sbr.rel (%p180) target = $region45
    $region44: #{tpu_custom_call.1} parent=1 // pred_region
      %v183 = vld [vmem:[#allocation2] sm:$0xff]
      %v184 = vld [vmem:[#allocation2 + $0x8] sm:$0xff]
      %v185 = vld [vmem:[#allocation8] sm:$0x3]
      %v186 = vadd.f32 %v183, %v184
      %v187 = vrot.slane %v186, 4
      %v188 = vadd.f32 %v186, %v187
      %v189 = vrot.slane %v188, 2
      %v190 = vadd.f32 %v188, %v189
      %v191 = vrot.slane %v190, 1
      %v192 = vadd.f32 %v190, %v191
      %v193 = vrcp.pop 16.0
      %v194 = vmul.f32 16.0, %v193
      %v195 = vsub.f32 1.0, %v194
      %v196 = vmul.f32 %v193, %v195
      %v197 = vadd.f32 %v193, %v196
      %vm198 = vweird.f32 %v193
      %v199 = vsel %vm198, %v193, %v197
      %v200 = vmul.f32 %v192, %v199
      %v201 = vsub.f32 %v183, %v200
      %v202 = vsub.f32 %v184, %v200
      %v203 = vmul.f32 %v201, %v201
      %v204 = vmul.f32 %v202, %v202
      %v205 = vadd.f32 %v203, %v204
      %v206 = vrot.slane %v205, 4
      %v207 = vadd.f32 %v205, %v206
      %v208 = vrot.slane %v207, 2
      %v209 = vadd.f32 %v207, %v208
      %v210 = vrot.slane %v209, 1
      %v211 = vadd.f32 %v209, %v210
      %v212 = vmul.f32 %v211, %v199
      %v213 = vadd.f32 %v212, 1e-05
      %v214 = vrsqrt.pop %v213
      %v215 = vmul.f32 %v214, %v213
      %v216 = vmul.f32 %v215, %v214
      %v217 = vmul.f32 0.5, %v216
      %v218 = vsub.f32 1.5, %v217
      %v219 = vmul.f32 %v214, %v218
      %vm220 = vweird.f32 %v213
      %vm221 = vweird.f32 %v214
      %vm222 = vmor %vm220, %vm221
      %v223 = vsel %vm222, %v214, %v219
      %v224 = vmul.f32 %v201, %v223
      %v225 = vmul.f32 %v202, %v223
      %v226 = vperm.slane %v185, 0
      %v227 = vmul.f32 %v224, %v226
      %v228 = vmul.f32 %v225, %v226
      %v229 = vperm.slane %v185, 1
      %v230 = vadd.f32 %v227, %v229
      %v231 = vadd.f32 %v228, %v229
      %v232 = vmax.f32 %v230, 0.0
      %v233 = vmax.f32 %v231, 0.0
      %v234 = vld [vmem:[#allocation9] sm:$0xff]
      %v235 = vld [vmem:[#allocation9 + $0x8] sm:$0xff]
      %v236 = vld [vmem:[#allocation9 + $0x10] sm:$0xff]
      %v237 = vld [vmem:[#allocation9 + $0x18] sm:$0xff]
      %v238 = vld [vmem:[#allocation9 + $0x20] sm:$0xff]
      %v239 = vld [vmem:[#allocation9 + $0x28] sm:$0xff]
      %v240 = vld [vmem:[#allocation9 + $0x30] sm:$0xff]
      %v241 = vld [vmem:[#allocation9 + $0x38] sm:$0xff]
      %v242 = vld [vmem:[#allocation9 + $0x40] sm:$0xff]
      %v243 = vld [vmem:[#allocation9 + $0x48] sm:$0xff]
      %v244 = vld [vmem:[#allocation9 + $0x50] sm:$0xff]
      %v245 = vld [vmem:[#allocation9 + $0x58] sm:$0xff]
      %v246 = vld [vmem:[#allocation9 + $0x60] sm:$0xff]
      %v247 = vld [vmem:[#allocation9 + $0x68] sm:$0xff]
      %v248 = vld [vmem:[#allocation9 + $0x70] sm:$0xff]
      %v249 = vld [vmem:[#allocation9 + $0x78] sm:$0xff]
      %250 = vmatpush.msra.mxu0 %v249
      %251 = vmatpush.msra.mxu0 %v248
      %252 = vmatpush.msra.mxu0 %v247
      %253 = vmatpush.msra.mxu0 %v246
      %254 = vmatpush.msra.mxu0 %v245
      %255 = vmatpush.msra.mxu0 %v244
      %256 = vmatpush.msra.mxu0 %v243
      %257 = vmatpush.msra.mxu0 %v242
      %258 = vmatpush.msra.mxu0 %v241
      %259 = vmatpush.msra.mxu0 %v240
      %260 = vmatpush.msra.mxu0 %v239
      %261 = vmatpush.msra.mxu0 %v238
      %262 = vmatpush.msra.mxu0 %v237
      %263 = vmatpush.msra.mxu0 %v236
      %264 = vmatpush.msra.mxu0 %v235
      %265 = vmatpush.msra.mxu0 %v234
      %266 = vmatmul.f32.gmra.mxu0 %v232
      %v267 = vpop.f32.mrf.mxu0
      %v268 = vadd.f32 0.0, %v267
      %269 = vmatmul.f32.gmra.mxu0 %v233
      %v270 = vpop.f32.mrf.mxu0
      %v271 = vadd.f32 0.0, %v270
      %272 = vdwg.mxu0
      %v273 = vld [vmem:[%s4] sm:$0x3]
      %v274 = vadd.f32 %v268, %v271
      %v275 = vrot.slane %v274, 4
      %v276 = vadd.f32 %v274, %v275
      %v277 = vrot.slane %v276, 2
      %v278 = vadd.f32 %v276, %v277
      %v279 = vrot.slane %v278, 1
      %v280 = vadd.f32 %v278, %v279
      %v281 = vmul.f32 %v280, %v199
      %v282 = vsub.f32 %v268, %v281
      %v283 = vsub.f32 %v271, %v281
      %v284 = vmul.f32 %v282, %v282
      %v285 = vmul.f32 %v283, %v283
      %v286 = vadd.f32 %v284, %v285
      %v287 = vrot.slane %v286, 4
      %v288 = vadd.f32 %v286, %v287
      %v289 = vrot.slane %v288, 2
      %v290 = vadd.f32 %v288, %v289
      %v291 = vrot.slane %v290, 1
      %v292 = vadd.f32 %v290, %v291
      %v293 = vmul.f32 %v292, %v199
      %v294 = vadd.f32 %v293, 1e-05
      %v295 = vrsqrt.pop %v294
      %v296 = vmul.f32 %v295, %v294
      %v297 = vmul.f32 %v296, %v295
      %v298 = vmul.f32 0.5, %v297
      %v299 = vsub.f32 1.5, %v298
      %v300 = vmul.f32 %v295, %v299
      %vm301 = vweird.f32 %v294
      %vm302 = vweird.f32 %v295
      %vm303 = vmor %vm301, %vm302
      %v304 = vsel %vm303, %v295, %v300
      %v305 = vmul.f32 %v282, %v304
      %v306 = vmul.f32 %v283, %v304
      %v307 = vperm.slane %v273, 0
      %v308 = vmul.f32 %v305, %v307
      %v309 = vmul.f32 %v306, %v307
      %v310 = vperm.slane %v273, 1
      %v311 = vadd.f32 %v308, %v310
      %v312 = vadd.f32 %v309, %v310
      %v313 = vxor.u32 %v311, 2147483648
      %v314 = vxor.u32 %v312, 2147483648
      %v315 = vmul.f32 %v313, 1.442695
      %v316 = vpow.pop %v315
      %v317 = vmul.f32 %v314, 1.442695
      %v318 = vpow.pop %v317
      %v319 = vadd.f32 %v316, 1.0
      %v320 = vadd.f32 %v318, 1.0
      %v321 = vrcp.pop %v319
      %v322 = vmul.f32 %v319, %v321
      %v323 = vsub.f32 1.0, %v322
      %v324 = vmul.f32 %v321, %v323
      %v325 = vadd.f32 %v321, %v324
      %vm326 = vweird.f32 %v319
      %vm327 = vweird.f32 %v321
      %vm328 = vmor %vm326, %vm327
      %v329 = vsel %vm328, %v321, %v325
      %v330 = vand.u32 2147483647, %v319
      %vm331 = vcmp.eq.f32.partialorder %v330, 8.507059e+37
      %v332 = vand.u32 %v319, 2147483648
      %v333 = vor.u32 1.1754944e-38, %v332
      %v334 = vsel %vm331, %v333, %v329
      %v335 = vmul.f32 1.0, %v334
      %v336 = vrcp.pop %v320
      %v337 = vmul.f32 %v320, %v336
      %v338 = vsub.f32 1.0, %v337
      %v339 = vmul.f32 %v336, %v338
      %v340 = vadd.f32 %v336, %v339
      %vm341 = vweird.f32 %v320
      %vm342 = vweird.f32 %v336
      %vm343 = vmor %vm341, %vm342
      %v344 = vsel %vm343, %v336, %v340
      %v345 = vand.u32 2147483647, %v320
      %vm346 = vcmp.eq.f32.partialorder %v345, 8.507059e+37
      %v347 = vand.u32 %v320, 2147483648
      %v348 = vor.u32 1.1754944e-38, %v347
      %v349 = vsel %vm346, %v348, %v344
      %v350 = vmul.f32 1.0, %v349
      %351 = vst [vmem:[#allocation11] sm:$0xff] %v335
      %352 = vst [vmem:[#allocation11 + $0x8] sm:$0xff] %v350
    $region45: #{tpu_custom_call.1} parent=1 // pred_fallthru
      _
    // Predicated region
    $region46: #{tpu_custom_call.1} parent=1 // pred_check
      _
    $region47: #{tpu_custom_call.1} parent=1 // pred_check_branch
      %354 = sbr.rel (0) target = $region49
    $region48: #{tpu_custom_call.1} parent=1 // pred_region
      %356 = vsyncadd [#allocation5], 0
      %s357 = sshll.u32 [#allocation11], 4
      %s358 = int_to_ptr.vmem [resolvable:$true] %s357
      %s359 = sshll.u32 %s5, 4
      %s360 = int_to_ptr.hbm [resolvable:$true] %s359
      %365 = dma.vmem_to_hbm [thread:$0]  %s358, 256, %s360, [#allocation5], 128, 128, 8
    $region49: #{tpu_custom_call.1} parent=1 // pred_fallthru
      _
    // Predicated region
    $region50: #{tpu_custom_call.1} parent=1 // pred_check
      _
    $region51: #{tpu_custom_call.1} parent=1 // pred_check_branch
      %367 = sbr.rel (0) target = $region53
    $region52: #{tpu_custom_call.1} parent=1 // pred_region
      %369 = dma.done [#allocation5], 256
    $region53: #{tpu_custom_call.1} parent=1 // pred_fallthru
      _
    %370 = vsyncpa [#allocation4], 1
    %371 = vsyncpa [#allocation7], 1
    %372 = vsyncpa [#allocation10], 1
    %373 = vsyncpa [#allocation5], 1

</llo_original>
